<compile_context>
chip_gen: v6e
topology: v6e:2x2x1
jax: 0.10.0
libtpu: 0.0.40
codegen_flags: <defaults>
</compile_context>

<pallas_src>
import functools

import jax
import jax.numpy as jnp
from jax.experimental import pallas as pl
from jax.experimental.pallas import tpu as pltpu


def _round_up(x, m):
    return ((x + m - 1) // m) * m


def _infonce_kernel(feat_ref, zt_ref, psum_ref, *, batch, n_valid, tm, use_max_sub):
    """One row-tile: MXU matmul -> post-matmul row normalize -> masked CE partial sum."""
    i = pl.program_id(0)

    f = feat_ref[...]          # (TM, D), MXU operand stays in the input dtype
    zt = zt_ref[...]           # (D, B_pad), pre-normalized and pre-scaled by 1/temp

    # MXU matmul in the operand dtype; f32 accumulate.
    raw = jnp.dot(f, zt, preferred_element_type=jnp.float32)      # (TM, B_pad)

    # F.normalize(f, dim=1, eps=1e-12) applied post-matmul:
    #   (f / max(||f||, eps)) @ z  ==  (f @ z) * rsqrt(max(||f||^2, eps^2))
    f32 = f.astype(jnp.float32)
    sumsq = jnp.sum(f32 * f32, axis=1, keepdims=True)              # (TM, 1)
    row_scale = jax.lax.rsqrt(jnp.maximum(sumsq, jnp.float32(1e-24)))
    logits = raw * row_scale                                       # (TM, B_pad) f32, already /temp

    n_rows, n_cols = logits.shape
    col_ids = jax.lax.broadcasted_iota(jnp.int32, (n_rows, n_cols), 1)
    global_rows = jax.lax.broadcasted_iota(jnp.int32, (n_rows, n_cols), 0) + i * tm

    # Lane-padded batch columns are excluded from the softmax; the positive of
    # (global) row r is column r % batch (never a padded column).
    col_valid = col_ids < batch
    pos_mask = (global_rows % batch) == col_ids
    pos = jnp.sum(jnp.where(pos_mask, logits, 0.0), axis=1, keepdims=True)    # (TM, 1)

    if use_max_sub:
        # General path (extremely small temp): classic masked, max-subtracted LSE.
        masked = jnp.where(col_valid, logits, jnp.float32(-1e30))
        m = jnp.max(masked, axis=1, keepdims=True)
        lse = m + jnp.log(jnp.sum(jnp.exp(masked - m), axis=1, keepdims=True))
    else:
        # Unit-norm rows/cols bound |logits| <= 1/temp: exp cannot overflow, so
        # skip the XLU max reduce + full-tile subtract; mask padded lanes on exp.
        e = jnp.where(col_valid, jnp.exp(logits), 0.0)
        lse = jnp.log(jnp.sum(e, axis=1, keepdims=True))

    # Rows past the true N (row-tile padding) contribute 0 to the sum.
    row_ids = jax.lax.broadcasted_iota(jnp.int32, (n_rows, 1), 0) + i * tm
    per_row = jnp.where(row_ids < n_valid, lse - pos, 0.0)                    # (TM, 1)

    psum = jnp.sum(per_row, axis=0, keepdims=True)                            # (1, 1)
    # Lane-dense (8,128) output slab per tile; wrapper reads element [0,0].
    psum_ref[...] = jnp.broadcast_to(psum.reshape(1, 1, 1), psum_ref.shape)


def infonce_loss_ver2(features_list, temp, *, tm=2048, vmem_budget_bytes=24 << 20):
    """features_list: list of (batch, dim) arrays. Returns scalar f32 loss."""
    num_patch = len(features_list)
    batch, dim = features_list[0].shape
    n = num_patch * batch
    inv_temp = 1.0 / float(temp)

    # Single stacked array: mean for z_avg, reshape (== concat) for feats.
    z_stack = jnp.stack(features_list, axis=0)                    # (P, B, D)
    feats = z_stack.reshape(n, dim)                                # (N, D), no extra concat copy
    mxu_dtype = feats.dtype

    # z side hoisted out of the kernel (it is a resident block): f32 mean,
    # F.normalize, 1/temp fold, transpose to (D, B), lane-pad B to 128.
    z_avg = jnp.mean(z_stack.astype(jnp.float32), axis=0)          # (B, D) f32 accumulate
    z_scale = jax.lax.rsqrt(
        jnp.maximum(jnp.sum(z_avg * z_avg, axis=1, keepdims=True), jnp.float32(1e-24)))
    z_norm = z_avg * (z_scale * jnp.float32(inv_temp))             # (B, D)
    b_pad = _round_up(max(batch, 128), 128)
    z_t = z_norm.T                                                 # (D, B)
    if b_pad > batch:
        z_t = jnp.pad(z_t, ((0, 0), (0, b_pad - batch)))           # padded cols are 0 -> masked
    z_t = z_t.astype(mxu_dtype)                                    # MXU operand dtype

    # Row tile: multiple of 8, capped so double-buffered feats + resident z +
    # f32 logits temporaries fit a conservative budget (within the 32 MiB
    # scoped VMEM default on v7x; ample headroom on v5e/v6e).
    itemsize = jnp.dtype(mxu_dtype).itemsize
    tm_eff = _round_up(min(tm, _round_up(n, 8)), 8)

    def _vmem_est(t):
        return (2 * t * dim * itemsize         # double-buffered feats tiles
                + dim * b_pad * itemsize       # resident z_t
                + 3 * t * b_pad * 4            # f32 logits / exp temporaries
                + 2 * 8 * 128 * 4)             # output slabs

    while tm_eff > 8 and _vmem_est(tm_eff) > vmem_budget_bytes:
        tm_eff = max(8, _round_up(tm_eff // 2, 8))

    n_pad = _round_up(n, tm_eff)
    if n_pad > n:
        feats = jnp.pad(feats, ((0, n_pad - n), (0, 0)))
    num_tiles = n_pad // tm_eff

    kernel = functools.partial(
        _infonce_kernel,
        batch=batch,
        n_valid=n,
        tm=tm_eff,
        use_max_sub=inv_temp >= 80.0,          # unit-norm bound |logits| <= 1/temp
    )

    partials = pl.pallas_call(
        kernel,
        out_shape=jax.ShapeDtypeStruct((num_tiles, 8, 128), jnp.float32),
        grid=(num_tiles,),
        in_specs=[
            pl.BlockSpec((tm_eff, dim), lambda i: (i, 0)),   # feats: row-tiled, pipelined
            pl.BlockSpec((dim, b_pad), lambda i: (0, 0)),    # z_t: resident across tiles
        ],
        out_specs=pl.BlockSpec((1, 8, 128), lambda i: (i, 0, 0)),
        compiler_params=pltpu.CompilerParams(
            dimension_semantics=("parallel",),               # shards tiles across TCs (v7x)
            vmem_limit_bytes=32 << 20),
    )(feats, z_t)

    return jnp.sum(partials[:, 0, 0]) / float(n)


def _reference_loss(features_list, temp):
    """Pure-JAX reference mirroring the PyTorch forward exactly."""
    num_patch = len(features_list)
    batch = features_list[0].shape[0]
    z_avg = jnp.mean(jnp.stack(features_list, 0), axis=0)
    feats = jnp.concatenate(features_list, axis=0)
    eps = 1e-12
    feats = feats / jnp.maximum(jnp.linalg.norm(feats, axis=1, keepdims=True), eps)
    z_avg = z_avg / jnp.maximum(jnp.linalg.norm(z_avg, axis=1, keepdims=True), eps)
    sim = feats @ z_avg.T / temp                      # (N, B)
    n = num_patch * batch
    pos_col = jnp.arange(n) % batch
    pos = sim[jnp.arange(n), pos_col]
    lse = jax.scipy.special.logsumexp(sim, axis=1)
    return jnp.mean(lse - pos)


if __name__ == "__main__":
    temp = 0.5

    # Config 1: single-tile path (num_patch=4, batch=8, dim=32), f32.
    num_patch, batch, dim = 4, 8, 32
    keys = jax.random.split(jax.random.PRNGKey(0), num_patch)
    features = [jax.random.normal(k, (batch, dim), dtype=jnp.float32) for k in keys]
    loss = infonce_loss_ver2(features, temp)
    jax.block_until_ready(loss)
    ref = _reference_loss(features, temp)
    assert jnp.allclose(loss, ref, atol=1e-5, rtol=1e-5), (loss, ref)

    # Config 2: multi-tile grid + row padding + lane padding, f32.
    num_patch2, batch2, dim2 = 5, 6, 48
    keys2 = jax.random.split(jax.random.PRNGKey(1), num_patch2)
    features2 = [jax.random.normal(k, (batch2, dim2), dtype=jnp.float32) for k in keys2]
    loss2 = infonce_loss_ver2(features2, temp, tm=16)
    jax.block_until_ready(loss2)
    ref2 = _reference_loss(features2, temp)
    assert jnp.allclose(loss2, ref2, atol=1e-5, rtol=1e-5), (loss2, ref2)

    # Config 3: bf16 inputs stay bf16 on the MXU (f32 accumulate); compared to
    # the f32 reference with a correspondingly looser tolerance.
    num_patch3, batch3, dim3 = 8, 16, 64
    keys3 = jax.random.split(jax.random.PRNGKey(2), num_patch3)
    features3 = [jax.random.normal(k, (batch3, dim3), dtype=jnp.float32).astype(jnp.bfloat16)
                 for k in keys3]
    loss3 = infonce_loss_ver2(features3, temp, tm=64)
    jax.block_until_ready(loss3)
    ref3 = _reference_loss([f.astype(jnp.float32) for f in features3], temp)
    assert jnp.isfinite(loss3), loss3
    assert jnp.allclose(loss3, ref3, atol=5e-2, rtol=5e-2), (loss3, ref3)

    print("KERNEL_OK")
</pallas_src>

<mosaic_0001>
module attributes {stable_mosaic.version = 11 : i64} {
  func.func @_infonce_kernel(%arg0: i32, %arg1: memref<32x32xf32, #tpu.memory_space<vmem>>, %arg2: memref<32x128xf32, #tpu.memory_space<vmem>>, %arg3: memref<1x8x128xf32, #tpu.memory_space<vmem>>) attributes {dimension_semantics = [#tpu.dimension_semantics<parallel>], iteration_bounds = array<i64: 1>, scalar_prefetch = 0 : i64, scratch_operands = 0 : i64, tpu.core_type = #tpu.core_type<tc>, window_params = [{transform_indices = @transform_0, window_bounds = array<i64: 32, 32>}, {pipeline_mode = #tpu.pipeline_mode<synchronous>, transform_indices = @transform_1, window_bounds = array<i64: 32, 128>}, {transform_indices = @transform_2, window_bounds = array<i64: 1, 8, 128>}]} {
    %c0 = arith.constant 0 : index
    %c0_0 = arith.constant 0 : index
    %0 = vector.load %arg1[%c0, %c0_0] : memref<32x32xf32, #tpu.memory_space<vmem>>, vector<32x32xf32>
    %c0_1 = arith.constant 0 : index
    %c0_2 = arith.constant 0 : index
    %1 = vector.load %arg2[%c0_1, %c0_2] : memref<32x128xf32, #tpu.memory_space<vmem>>, vector<32x128xf32>
    %cst = arith.constant dense<0.000000e+00> : vector<32x128xf32>
    %2 = tpu.matmul %0, %1, %cst {dimension_numbers = #tpu.dot_dimension_numbers<[1], [0], [0], [1], [0, 0, 1, 1], [], []>} : vector<32x32xf32>, vector<32x128xf32>, vector<32x128xf32> -> vector<32x128xf32>
    %3 = arith.mulf %0, %0 : vector<32x32xf32>
    %cst_3 = arith.constant dense<0.000000e+00> : vector<32xf32>
    %4 = vector.multi_reduction <add>, %3, %cst_3 [1] : vector<32x32xf32> to vector<32xf32>
    %5 = vector.shape_cast %4 : vector<32xf32> to vector<32x1xf32>
    %cst_4 = arith.constant 1.000000e-24 : f32
    %6 = vector.broadcast %cst_4 : f32 to vector<32x1xf32>
    %7 = arith.maximumf %5, %6 : vector<32x1xf32>
    %8 = math.rsqrt %7 : vector<32x1xf32>
    %9 = vector.broadcast %8 : vector<32x1xf32> to vector<32x128xf32>
    %10 = arith.mulf %2, %9 : vector<32x128xf32>
    %11 = tpu.iota {dimensions = array<i32: 1>} : vector<32x128xi32>
    %12 = tpu.iota {dimensions = array<i32: 0>} : vector<32x128xi32>
    %c32_i32 = arith.constant 32 : i32
    %13 = arith.muli %arg0, %c32_i32 : i32
    %14 = vector.broadcast %13 : i32 to vector<32x128xi32>
    %15 = arith.addi %12, %14 : vector<32x128xi32>
    %c8_i32 = arith.constant 8 : i32
    %16 = vector.broadcast %c8_i32 : i32 to vector<32x128xi32>
    %17 = arith.cmpi slt, %11, %16 : vector<32x128xi32>
    %c8_i32_5 = arith.constant 8 : i32
    %c0_i32 = arith.constant 0 : i32
    %18 = arith.cmpi eq, %c8_i32_5, %c0_i32 : i32
    %c1_i32 = arith.constant 1 : i32
    %19 = arith.select %18, %c1_i32, %c8_i32_5 : i32
    %20 = vector.broadcast %19 : i32 to vector<32x128xi32>
    %21 = arith.remsi %15, %20 : vector<32x128xi32>
    %c0_i32_6 = arith.constant 0 : i32
    %22 = vector.broadcast %c0_i32_6 : i32 to vector<32x128xi32>
    %23 = arith.cmpi ne, %21, %22 : vector<32x128xi32>
    %c0_i32_7 = arith.constant 0 : i32
    %24 = vector.broadcast %c0_i32_7 : i32 to vector<32x128xi32>
    %25 = arith.cmpi slt, %21, %24 : vector<32x128xi32>
    %c0_i32_8 = arith.constant 0 : i32
    %26 = arith.cmpi slt, %19, %c0_i32_8 : i32
    %27 = vector.broadcast %26 : i1 to vector<32x128xi1>
    %28 = vector.broadcast %27 : vector<32x128xi1> to vector<32x128xi1>
    %29 = arith.xori %25, %28 : vector<32x128xi1>
    %30 = arith.andi %29, %23 : vector<32x128xi1>
    %31 = vector.broadcast %19 : i32 to vector<32x128xi32>
    %32 = arith.addi %21, %31 : vector<32x128xi32>
    %33 = arith.select %30, %32, %21 : vector<32x128xi1>, vector<32x128xi32>
    %34 = arith.cmpi eq, %33, %11 : vector<32x128xi32>
    %cst_9 = arith.constant 0.000000e+00 : f32
    %35 = vector.broadcast %cst_9 : f32 to vector<32x128xf32>
    %36 = arith.select %34, %10, %35 : vector<32x128xi1>, vector<32x128xf32>
    %cst_10 = arith.constant dense<0.000000e+00> : vector<32xf32>
    %37 = vector.multi_reduction <add>, %36, %cst_10 [1] : vector<32x128xf32> to vector<32xf32>
    %38 = vector.shape_cast %37 : vector<32xf32> to vector<32x1xf32>
    %39 = math.exp %10 : vector<32x128xf32>
    %cst_11 = arith.constant 0.000000e+00 : f32
    %40 = vector.broadcast %cst_11 : f32 to vector<32x128xf32>
    %41 = arith.select %17, %39, %40 : vector<32x128xi1>, vector<32x128xf32>
    %cst_12 = arith.constant dense<0.000000e+00> : vector<32xf32>
    %42 = vector.multi_reduction <add>, %41, %cst_12 [1] : vector<32x128xf32> to vector<32xf32>
    %43 = vector.shape_cast %42 : vector<32xf32> to vector<32x1xf32>
    %44 = math.log %43 : vector<32x1xf32>
    %45 = tpu.iota {dimensions = array<i32: 0>} : vector<32x1xi32>
    %c32_i32_13 = arith.constant 32 : i32
    %46 = arith.muli %arg0, %c32_i32_13 : i32
    %47 = vector.broadcast %46 : i32 to vector<32x1xi32>
    %48 = arith.addi %45, %47 : vector<32x1xi32>
    %c32_i32_14 = arith.constant 32 : i32
    %49 = vector.broadcast %c32_i32_14 : i32 to vector<32x1xi32>
    %50 = arith.cmpi slt, %48, %49 : vector<32x1xi32>
    %51 = arith.subf %44, %38 : vector<32x1xf32>
    %cst_15 = arith.constant 0.000000e+00 : f32
    %52 = vector.broadcast %cst_15 : f32 to vector<32x1xf32>
    %53 = arith.select %50, %51, %52 : vector<32x1xi1>, vector<32x1xf32>
    %cst_16 = arith.constant dense<0.000000e+00> : vector<1xf32>
    %54 = vector.multi_reduction <add>, %53, %cst_16 [0] : vector<32x1xf32> to vector<1xf32>
    %55 = vector.shape_cast %54 : vector<1xf32> to vector<1x1xf32>
    %56 = vector.shape_cast %55 : vector<1x1xf32> to vector<1x1x1xf32>
    %57 = vector.shape_cast %56 : vector<1x1x1xf32> to vector<1x1x1xf32>
    %58 = vector.broadcast %57 : vector<1x1x1xf32> to vector<1x8x128xf32>
    %c0_17 = arith.constant 0 : index
    %c0_18 = arith.constant 0 : index
    %c0_19 = arith.constant 0 : index
    %59 = vector.load %arg3[%c0_17, %c0_18, %c0_19] : memref<1x8x128xf32, #tpu.memory_space<vmem>>, vector<1x8x128xf32>
    tpu.vector_store %arg3[%c0_17, %c0_18, %c0_19], %58 {strides = array<i32>} : memref<1x8x128xf32, #tpu.memory_space<vmem>>, vector<1x8x128xf32>,
    return
  }
  func.func @transform_0(%arg0: i32) -> (i32, i32) {
    %c0_i32 = arith.constant 0 : i32
    %c0_i32_0 = arith.constant 0 : i32
    return %arg0, %c0_i32 : i32, i32
  }
  func.func @transform_1(%arg0: i32) -> (i32, i32) {
    %c0_i32 = arith.constant 0 : i32
    %c0_i32_0 = arith.constant 0 : i32
    %c0_i32_1 = arith.constant 0 : i32
    return %c0_i32, %c0_i32_0 : i32, i32
  }
  func.func @transform_2(%arg0: i32) -> (i32, i32, i32) {
    %c0_i32 = arith.constant 0 : i32
    %c0_i32_0 = arith.constant 0 : i32
    %c0_i32_1 = arith.constant 0 : i32
    return %arg0, %c0_i32, %c0_i32_0 : i32, i32, i32
  }
}

</mosaic_0001>

<llo_original>
// kernel: tpu_custom_call.1
$region0: #{tpu_custom_call.1}
  #allocation0 [shape = 'u32[]', space=smem, size = 0x4, offset = 0x4, fixed_abs, tag = 'smem constant byte address 0x4 - core index']
  #allocation1 [shape = 'u32[144,128]{1,0:T(1,128)}', space=vmem, size = 0x12000, scoped, tag = 'internal scratch']
  %s0 = inlined_call_operand.hbm [shape: f32[32,32], index: 0, kind: input, shape index: {}]
  %s1 = inlined_call_operand.hbm [shape: f32[32,128], index: 1, kind: input, shape index: {}]
  %s2 = inlined_call_operand.hbm [shape: f32[1,8,128], index: 2, kind: output, shape index: {}]
  %s3 = sld [smem:[#allocation0]]
  $region26: #{tpu_custom_call.1} parent=0
    _
  %s5 = ssub.s32 1, %s3
  %s6 = scalar_select 0, %s5, %s3
  $region1: #{tpu_custom_call.1} parent=0
    #allocation2 [shape = 'u8[16384]{0}', space=vmem, size = 0x4000, scoped, tag = 'input window, operand 0, single buffered']
    #allocation3 [shape = 's32[1]{0}', space=sflag, size = 0x4, scoped, tag = 'scoped memory for tpu_custom_call.1']
    #allocation4 [shape = 's32[1]{0}', space=sflag, size = 0x4, scoped, tag = 'scoped memory for tpu_custom_call.1']
    #allocation5 [shape = 'u8[16384]{0}', space=vmem, size = 0x4000, scoped, tag = 'input window, operand 1, single buffered']
    #allocation6 [shape = 's32[1]{0}', space=sflag, size = 0x4, scoped, tag = 'scoped memory for tpu_custom_call.1']
    #allocation7 [shape = 'u8[4096]{0}', space=vmem, size = 0x1000, scoped, tag = 'output window, operand 0, single buffered']
    %7 = vsyncpa [#allocation3], 0
    %8 = vsyncpa [#allocation6], 0
    %9 = vsyncpa [#allocation4], 0
    // Predicated region
    $region2: #{tpu_custom_call.1} parent=1 // pred_check
      _
    $region3: #{tpu_custom_call.1} parent=1 // pred_check_branch
      %11 = sbr.rel (0) target = $region5
    $region4: #{tpu_custom_call.1} parent=1 // pred_region
      %s13 = ssub.s32 512, 512
      %14 = vsyncadd [#allocation3], %s13
      %s15 = sshll.u32 [#allocation2], 4
      %s16 = int_to_ptr.vmem [resolvable:$true] %s15
      %21 = dma.hbm_to_vmem [thread:$0]  %s0, 512, %s16, [#allocation3], 128, 128, 8
    $region5: #{tpu_custom_call.1} parent=1 // pred_fallthru
      _
    // Predicated region
    $region6: #{tpu_custom_call.1} parent=1 // pred_check
      _
    $region7: #{tpu_custom_call.1} parent=1 // pred_check_branch
      %23 = sbr.rel (0) target = $region9
    $region8: #{tpu_custom_call.1} parent=1 // pred_region
      %s25 = ssub.s32 512, 512
      %26 = vsyncadd [#allocation6], %s25
      %s27 = sshll.u32 [#allocation5], 4
      %s28 = int_to_ptr.vmem [resolvable:$true] %s27
      %33 = dma.hbm_to_vmem [thread:$0]  %s1, 512, %s28, [#allocation6], 128, 128, 8
    $region9: #{tpu_custom_call.1} parent=1 // pred_fallthru
      _
    // Predicated region
    $region10: #{tpu_custom_call.1} parent=1 // pred_check
      _
    $region11: #{tpu_custom_call.1} parent=1 // pred_check_branch
      %35 = sbr.rel (0) target = $region13
    $region12: #{tpu_custom_call.1} parent=1 // pred_region
      %36 = dma.done [#allocation3], 512
    $region13: #{tpu_custom_call.1} parent=1 // pred_fallthru
      _
    // Predicated region
    $region14: #{tpu_custom_call.1} parent=1 // pred_check
      _
    $region15: #{tpu_custom_call.1} parent=1 // pred_check_branch
      %38 = sbr.rel (0) target = $region17
    $region16: #{tpu_custom_call.1} parent=1 // pred_region
      %39 = dma.done [#allocation6], 512
    $region17: #{tpu_custom_call.1} parent=1 // pred_fallthru
      _
    %v40 = vld [vmem:[#allocation2] sm:$0xff]
    %v41 = vld [vmem:[#allocation2 + $0x8] sm:$0xff]
    %v42 = vld [vmem:[#allocation2 + $0x10] sm:$0xff]
    %v43 = vld [vmem:[#allocation2 + $0x18] sm:$0xff]
    %v44 = vld [vmem:[#allocation5] sm:$0xff]
    %v45 = vld [vmem:[#allocation5 + $0x8] sm:$0xff]
    %v46 = vld [vmem:[#allocation5 + $0x10] sm:$0xff]
    %v47 = vld [vmem:[#allocation5 + $0x18] sm:$0xff]
    %vm48 = vcmask 261120
    %v50 = vsel %vm48, %v40, 0
    %v53 = vsel %vm48, %v41, 0
    %v56 = vsel %vm48, %v42, 0
    %v59 = vsel %vm48, %v43, 0
    %61 = vmatprep.subr.mxu0 0.0
    %62 = vmatpush1.msra.mxu0 0.0
    %63 = vmatprep.subr.mxu0 0.0
    %64 = vmatpush1.msra.mxu0 0.0
    %65 = vmatprep.subr.mxu0 0.0
    %66 = vmatpush1.msra.mxu0 0.0
    %67 = vmatprep.subr.mxu0 0.0
    %68 = vmatpush1.msra.mxu0 0.0
    %69 = vmatprep.subr.mxu0 0.0
    %70 = vmatpush1.msra.mxu0 0.0
    %71 = vmatprep.subr.mxu0 0.0
    %72 = vmatpush1.msra.mxu0 0.0
    %73 = vmatprep.subr.mxu0 0.0
    %74 = vmatpush1.msra.mxu0 0.0
    %75 = vmatprep.subr.mxu0 0.0
    %76 = vmatpush1.msra.mxu0 0.0
    %77 = vmatprep.subr.mxu0 0.0
    %78 = vmatpush1.msra.mxu0 0.0
    %79 = vmatprep.subr.mxu0 0.0
    %80 = vmatpush1.msra.mxu0 0.0
    %81 = vmatprep.subr.mxu0 0.0
    %82 = vmatpush1.msra.mxu0 0.0
    %83 = vmatprep.subr.mxu0 0.0
    %84 = vmatpush1.msra.mxu0 0.0
    %85 = vmatprep.subr.mxu0 0.0
    %86 = vmatpush1.msra.mxu0 %v47
    %87 = vmatprep.subr.mxu0 0.0
    %88 = vmatpush1.msra.mxu0 %v46
    %89 = vmatprep.subr.mxu0 0.0
    %90 = vmatpush1.msra.mxu0 %v45
    %91 = vmatprep.subr.mxu0 0.0
    %92 = vmatpush1.msra.mxu0 %v44
    %93 = vmatprep.subr.mxu0 0.0
    %94 = vmatpush2.msra.mxu0 0.0
    %95 = vmatprep.subr.mxu0 0.0
    %96 = vmatpush2.msra.mxu0 0.0
    %97 = vmatprep.subr.mxu0 0.0
    %98 = vmatpush2.msra.mxu0 0.0
    %99 = vmatprep.subr.mxu0 0.0
    %100 = vmatpush2.msra.mxu0 0.0
    %101 = vmatprep.subr.mxu0 0.0
    %102 = vmatpush2.msra.mxu0 0.0
    %103 = vmatprep.subr.mxu0 0.0
    %104 = vmatpush2.msra.mxu0 0.0
    %105 = vmatprep.subr.mxu0 0.0
    %106 = vmatpush2.msra.mxu0 0.0
    %107 = vmatprep.subr.mxu0 0.0
    %108 = vmatpush2.msra.mxu0 0.0
    %109 = vmatprep.subr.mxu0 0.0
    %110 = vmatpush2.msra.mxu0 0.0
    %111 = vmatprep.subr.mxu0 0.0
    %112 = vmatpush2.msra.mxu0 0.0
    %113 = vmatprep.subr.mxu0 0.0
    %114 = vmatpush2.msra.mxu0 0.0
    %115 = vmatprep.subr.mxu0 0.0
    %116 = vmatpush2.msra.mxu0 0.0
    %117 = vmatprep.subr.mxu0 0.0
    %118 = vmatpush2.msra.mxu0 0.0
    %119 = vmatprep.subr.mxu0 0.0
    %120 = vmatpush2.msra.mxu0 0.0
    %121 = vmatprep.subr.mxu0 0.0
    %122 = vmatpush2.msra.mxu0 0.0
    %123 = vmatprep.subr.mxu0 0.0
    %124 = vmatpush2.msra.mxu0 0.0
    %125 = vmatprep.mubr.f32.mxu0 0.0
    %126 = vmatmul.mubr.f32.gmra.mxu0 %v50
    %v127 = vpop.f32.mrf.mxu0
    %v128 = vadd.f32 0.0, %v127
    %v129 = vpop.f32.mrf.mxu0
    %130 = vmatprep.mubr.f32.mxu0 0.0
    %131 = vmatmul.mubr.f32.gmra.mxu0 %v53
    %v132 = vpop.f32.mrf.mxu0
    %v133 = vadd.f32 0.0, %v132
    %v134 = vpop.f32.mrf.mxu0
    %135 = vmatprep.mubr.f32.mxu0 0.0
    %136 = vmatmul.mubr.f32.gmra.mxu0 %v56
    %v137 = vpop.f32.mrf.mxu0
    %v138 = vadd.f32 0.0, %v137
    %v139 = vpop.f32.mrf.mxu0
    %140 = vmatprep.mubr.f32.mxu0 0.0
    %141 = vmatmul.mubr.f32.gmra.mxu0 %v59
    %v142 = vpop.f32.mrf.mxu0
    %v143 = vadd.f32 0.0, %v142
    %v144 = vpop.f32.mrf.mxu0
    %145 = vdwg.mxu0
    %v146 = vmul.f32 %v40, %v40
    %v147 = vmul.f32 %v41, %v41
    %v148 = vmul.f32 %v42, %v42
    %v149 = vmul.f32 %v43, %v43
    %v150 = vsel %vm48, %v146, 0.0
    %151 = vadd.xlane.f32.xlu0 %v150
    %v152 = vpop.xlane.xlu0 %151
    %v153 = vsel %vm48, %v147, 0.0
    %154 = vadd.xlane.f32.xlu0 %v153
    %v155 = vpop.xlane.xlu0 %154
    %v156 = vsel %vm48, %v148, 0.0
    %157 = vadd.xlane.f32.xlu0 %v156
    %v158 = vpop.xlane.xlu0 %157
    %v159 = vsel %vm48, %v149, 0.0
    %160 = vadd.xlane.f32.xlu0 %v159
    %v161 = vpop.xlane.xlu0 %160
    %v162 = vmax.f32 %v152, 1e-24
    %v163 = vmax.f32 %v155, 1e-24
    %v164 = vmax.f32 %v158, 1e-24
    %v165 = vmax.f32 %v161, 1e-24
    %v166 = vrsqrt.pop %v162
    %v167 = vrsqrt.pop %v163
    %v168 = vrsqrt.pop %v164
    %v169 = vrsqrt.pop %v165
    %v170 = vmul.f32 %v128, %v166
    %v171 = vmul.f32 %v133, %v167
    %v172 = vmul.f32 %v138, %v168
    %v173 = vmul.f32 %v143, %v169
    %v174 = vlaneseq
    %v175 = vand.u32 %v174, 127
    %v176 = vlaneseq
    %v177 = vshrl.u32 %v176, 7
    %v178 = vadd.s32 %v177, 8
    %v179 = vadd.s32 %v177, 16
    %v180 = vadd.s32 %v177, 24
    %s181 = smul.u32 0, 32
    %v182 = vstv %s181
    %v183 = vadd.s32 %v177, %v182
    %v184 = vadd.s32 %v178, %v182
    %v185 = vadd.s32 %v179, %v182
    %v186 = vadd.s32 %v180, %v182
    %vm187 = vcmp.lt.s32.totalorder %v175, 8
    %vm188 = vcmp.lt.s32.totalorder %v183, 0
    %v189 = vsub.s32 0, %v183
    %v190 = vsel %vm188, %v189, %v183
    %v191 = vshrl.u32 %v190, 3
    %v192 = vand.u32 %v190, 7
    %v193 = vsub.s32 0, %v192
    %v194 = vsel %vm188, %v193, %v192
    %vm195 = vcmp.lt.s32.totalorder %v184, 0
    %v196 = vsub.s32 0, %v184
    %v197 = vsel %vm195, %v196, %v184
    %v198 = vshrl.u32 %v197, 3
    %v199 = vand.u32 %v197, 7
    %v200 = vsub.s32 0, %v199
    %v201 = vsel %vm195, %v200, %v199
    %vm202 = vcmp.lt.s32.totalorder %v185, 0
    %v203 = vsub.s32 0, %v185
    %v204 = vsel %vm202, %v203, %v185
    %v205 = vshrl.u32 %v204, 3
    %v206 = vand.u32 %v204, 7
    %v207 = vsub.s32 0, %v206
    %v208 = vsel %vm202, %v207, %v206
    %vm209 = vcmp.lt.s32.totalorder %v186, 0
    %v210 = vsub.s32 0, %v186
    %v211 = vsel %vm209, %v210, %v186
    %v212 = vshrl.u32 %v211, 3
    %v213 = vand.u32 %v211, 7
    %v214 = vsub.s32 0, %v213
    %v215 = vsel %vm209, %v214, %v213
    %vm216 = vcmp.ne.s32.totalorder %v194, 0
    %vm217 = vcmp.ne.s32.totalorder %v201, 0
    %vm218 = vcmp.ne.s32.totalorder %v208, 0
    %vm219 = vcmp.ne.s32.totalorder %v215, 0
    %vm220 = vcmp.lt.s32.totalorder %v194, 0
    %vm221 = vcmp.lt.s32.totalorder %v201, 0
    %vm222 = vcmp.lt.s32.totalorder %v208, 0
    %vm223 = vcmp.lt.s32.totalorder %v215, 0
    %vm224 = vmand %vm220, %vm216
    %vm225 = vmand %vm221, %vm217
    %vm226 = vmand %vm222, %vm218
    %vm227 = vmand %vm223, %vm219
    %v228 = vadd.s32 %v194, 8
    %v229 = vadd.s32 %v201, 8
    %v230 = vadd.s32 %v208, 8
    %v231 = vadd.s32 %v215, 8
    %v232 = vsel %vm224, %v228, %v194
    %v233 = vsel %vm225, %v229, %v201
    %v234 = vsel %vm226, %v230, %v208
    %v235 = vsel %vm227, %v231, %v215
    %vm236 = vcmp.eq.s32.totalorder %v232, %v175
    %vm237 = vcmp.eq.s32.totalorder %v233, %v175
    %vm238 = vcmp.eq.s32.totalorder %v234, %v175
    %vm239 = vcmp.eq.s32.totalorder %v235, %v175
    %v240 = vsel %vm236, %v170, 0.0
    %v241 = vsel %vm237, %v171, 0.0
    %v242 = vsel %vm238, %v172, 0.0
    %v243 = vsel %vm239, %v173, 0.0
    %244 = vadd.xlane.f32.xlu0 %v240
    %v245 = vpop.xlane.xlu0 %244
    %246 = vadd.xlane.f32.xlu0 %v241
    %v247 = vpop.xlane.xlu0 %246
    %248 = vadd.xlane.f32.xlu0 %v242
    %v249 = vpop.xlane.xlu0 %248
    %250 = vadd.xlane.f32.xlu0 %v243
    %v251 = vpop.xlane.xlu0 %250
    %v252 = vmul.f32 %v170, 1.442695
    %v253 = vpow.pop %v252
    %v254 = vmul.f32 %v171, 1.442695
    %v255 = vpow.pop %v254
    %v256 = vmul.f32 %v172, 1.442695
    %v257 = vpow.pop %v256
    %v258 = vmul.f32 %v173, 1.442695
    %v259 = vpow.pop %v258
    %v260 = vsel %vm187, %v253, 0.0
    %v261 = vsel %vm187, %v255, 0.0
    %v262 = vsel %vm187, %v257, 0.0
    %v263 = vsel %vm187, %v259, 0.0
    %264 = vadd.xlane.f32.xlu0 %v260
    %v265 = vpop.xlane.xlu0 %264
    %266 = vadd.xlane.f32.xlu0 %v261
    %v267 = vpop.xlane.xlu0 %266
    %268 = vadd.xlane.f32.xlu0 %v262
    %v269 = vpop.xlane.xlu0 %268
    %270 = vadd.xlane.f32.xlu0 %v263
    %v271 = vpop.xlane.xlu0 %270
    %v272 = vlog2.pop %v265
    %v273 = vmul.f32 %v272, 0.6931472
    %v274 = vlog2.pop %v267
    %v275 = vmul.f32 %v274, 0.6931472
    %v276 = vlog2.pop %v269
    %v277 = vmul.f32 %v276, 0.6931472
    %v278 = vlog2.pop %v271
    %v279 = vmul.f32 %v278, 0.6931472
    %vm280 = vcmp.lt.s32.totalorder %v183, 32
    %vm281 = vcmp.lt.s32.totalorder %v184, 32
    %vm282 = vcmp.lt.s32.totalorder %v185, 32
    %vm283 = vcmp.lt.s32.totalorder %v186, 32
    %v284 = vsub.f32 %v273, %v245
    %v285 = vsub.f32 %v275, %v247
    %v286 = vsub.f32 %v277, %v249
    %v287 = vsub.f32 %v279, %v251
    %v288 = vsel %vm280, %v284, 0.0
    %v289 = vsel %vm281, %v285, 0.0
    %v290 = vsel %vm282, %v286, 0.0
    %v291 = vsel %vm283, %v287, 0.0
    %v292 = vadd.f32 %v288, %v289
    %v293 = vadd.f32 %v292, %v290
    %v294 = vadd.f32 %v293, %v291
    %v295 = vrot.slane %v294, 4
    %v296 = vadd.f32 %v294, %v295
    %v297 = vrot.slane %v296, 2
    %v298 = vadd.f32 %v296, %v297
    %v299 = vrot.slane %v298, 1
    %v300 = vadd.f32 %v298, %v299
    %301 = vst [vmem:[#allocation7] sm:$0xff] %v300
    // Predicated region
    $region18: #{tpu_custom_call.1} parent=1 // pred_check
      _
    $region19: #{tpu_custom_call.1} parent=1 // pred_check_branch
      %303 = sbr.rel (0) target = $region21
    $region20: #{tpu_custom_call.1} parent=1 // pred_region
      %s305 = ssub.s32 128, 128
      %306 = vsyncadd [#allocation4], %s305
      %s308 = sshll.u32 [#allocation7], 4
      %s309 = int_to_ptr.vmem [resolvable:$true] %s308
      %311 = dma.vmem_to_hbm [thread:$0]  %s309, 128, %s2, [#allocation4]
    $region21: #{tpu_custom_call.1} parent=1 // pred_fallthru
      _
    // Predicated region
    $region22: #{tpu_custom_call.1} parent=1 // pred_check
      _
    $region23: #{tpu_custom_call.1} parent=1 // pred_check_branch
      %313 = sbr.rel (0) target = $region25
    $region24: #{tpu_custom_call.1} parent=1 // pred_region
      %314 = dma.done [#allocation4], 128
    $region25: #{tpu_custom_call.1} parent=1 // pred_fallthru
      _
    %315 = vsyncpa [#allocation3], 1
    %316 = vsyncpa [#allocation6], 1
    %317 = vsyncpa [#allocation4], 1

</llo_original>
